<compile_context>
chip_gen: v6e
topology: v6e:2x2x1
jax: 0.10.0
libtpu: 0.0.40
codegen_flags: <defaults>
</compile_context>

<pallas_src>
import functools

import jax
import jax.numpy as jnp
from jax.experimental import pallas as pl
from jax.experimental.pallas import tpu as pltpu


def _round_up(x, m):
    return ((x + m - 1) // m) * m


def _nntransfer_kernel(x_ref, w1_ref, b1_ref, w2_ref, b2_ref, o_ref, *, out_dim):
    # fc1 + ReLU.  f32 MXU matmul with f32 accumulation; compute is negligible
    # vs the HBM time of this memory-bound kernel, so full precision is free.
    h = jnp.dot(x_ref[...], w1_ref[...], preferred_element_type=jnp.float32)
    h = jnp.maximum(h + b1_ref[...], 0.0)

    # fc2.  W2 is zero-padded to 128 output lanes in the wrapper so the matmul
    # is lane-dense; slice back to the real output width before bias/softmax.
    logits = jnp.dot(h, w2_ref[...], preferred_element_type=jnp.float32)
    logits = logits[:, :out_dim] + b2_ref[...]

    # Numerically stable softmax with an exact divide: rows sum to 1 to f32
    # rounding (the previous approx reciprocal violated this invariant).
    m = jnp.max(logits, axis=-1, keepdims=True)
    e = jnp.exp(logits - m)
    s = jnp.sum(e, axis=-1, keepdims=True)
    o_ref[...] = (e / s).astype(o_ref.dtype)


def _choose_tile(B, tile_b):
    """Batch tile: large for DMA efficiency / per-step-overhead amortization,
    >=2 grid steps for large batches (v7x has 2 TensorCores), and always legal
    under the (8,128) block-shape constraint."""
    if B <= 256:
        # Single block equal to the full batch dim (block dim == array dim is
        # always a legal block shape, even when B isn't a multiple of 8).
        return B
    t = min(tile_b, _round_up(pl.cdiv(B, 2), 128))
    return max(128, _round_up(t, 128))


def nntransfer_forward(x, w1, b1, w2, b2, *, tile_b=2048):
    """x: (B, input_dim) f32.  Weights pre-transposed: w1 (in, 256),
    w2 (256, out); biases (1, 256) / (1, out).
    Returns (B, output_dim) f32 softmax probabilities."""
    B, in_dim = x.shape
    hid = w1.shape[1]
    out_dim = w2.shape[1]

    # Lane-dense second matmul: zero-pad W2's output axis to a multiple of 128.
    # Padded columns never reach the output (the kernel slices to out_dim
    # before bias/softmax/store).
    out_pad = max(128, _round_up(out_dim, 128))
    if out_pad != out_dim:
        w2_p = jnp.zeros((hid, out_pad), jnp.float32).at[:, :out_dim].set(w2)
    else:
        w2_p = w2.astype(jnp.float32)

    x = x.astype(jnp.float32)
    w1 = w1.astype(jnp.float32)
    b1 = b1.astype(jnp.float32).reshape(1, hid)
    b2 = b2.astype(jnp.float32).reshape(1, out_dim)

    eff_tile = _choose_tile(B, tile_b)
    grid = (pl.cdiv(B, eff_tile),)  # ragged last tile handled by Pallas; rows
                                    # are independent so OOB rows are dropped.

    cost = pl.CostEstimate(
        flops=2 * B * (in_dim * hid + hid * out_pad),
        transcendentals=B * out_dim,
        bytes_accessed=4 * (B * in_dim + B * out_dim
                            + in_dim * hid + hid * out_pad + hid + out_dim),
    )

    kernel = functools.partial(_nntransfer_kernel, out_dim=out_dim)

    return pl.pallas_call(
        kernel,
        out_shape=jax.ShapeDtypeStruct((B, out_dim), jnp.float32),
        grid_spec=pltpu.PrefetchScalarGridSpec(
            num_scalar_prefetch=0,
            grid=grid,
            in_specs=[
                pl.BlockSpec((eff_tile, in_dim), lambda i: (i, 0)),  # x tile
                pl.BlockSpec((in_dim, hid), lambda i: (0, 0)),       # W1 (resident)
                pl.BlockSpec((1, hid), lambda i: (0, 0)),            # b1
                pl.BlockSpec((hid, out_pad), lambda i: (0, 0)),      # W2 (resident)
                pl.BlockSpec((1, out_dim), lambda i: (0, 0)),        # b2
            ],
            out_specs=pl.BlockSpec((eff_tile, out_dim), lambda i: (i, 0)),
        ),
        compiler_params=pltpu.CompilerParams(
            dimension_semantics=("parallel",)),
        cost_estimate=cost,
    )(x, w1, b1, w2_p, b2)


def init_params(key, input_dim=128, hidden=256, output_dim=10):
    """Deterministic init mimicking nn.Linear defaults (uniform +-1/sqrt(fan_in)).
    Weights stored pre-transposed: (in, out)."""
    k1, k2, k3, k4 = jax.random.split(key, 4)
    lim1 = 1.0 / jnp.sqrt(input_dim)
    lim2 = 1.0 / jnp.sqrt(hidden)
    w1 = jax.random.uniform(k1, (input_dim, hidden), jnp.float32, -lim1, lim1)
    b1 = jax.random.uniform(k2, (1, hidden), jnp.float32, -lim1, lim1)
    w2 = jax.random.uniform(k3, (hidden, output_dim), jnp.float32, -lim2, lim2)
    b2 = jax.random.uniform(k4, (1, output_dim), jnp.float32, -lim2, lim2)
    return w1, b1, w2, b2


def reference_forward(x, w1, b1, w2, b2):
    h = jnp.maximum(x @ w1 + b1, 0.0)
    logits = h @ w2 + b2
    return jax.nn.softmax(logits, axis=1)


def _check(B, input_dim, output_dim, key):
    kx, kp = jax.random.split(key)
    x = jax.random.normal(kx, (B, input_dim), jnp.float32)
    w1, b1, w2, b2 = init_params(kp, input_dim=input_dim, hidden=256,
                                 output_dim=output_dim)
    out = jax.block_until_ready(nntransfer_forward(x, w1, b1, w2, b2))
    ref = reference_forward(x, w1, b1, w2, b2)
    assert out.shape == (B, output_dim)
    assert jnp.allclose(out, ref, atol=1e-2, rtol=1e-2)
    # Exact softmax divide -> rows sum to 1 within f32 rounding.
    assert jnp.allclose(jnp.sum(out, axis=1), 1.0, atol=1e-4)


if __name__ == "__main__":
    key = jax.random.PRNGKey(0)
    k_small, k_big = jax.random.split(key)

    # Small demo shape consistent with the module (input_dim=128, output_dim=10).
    _check(B=16, input_dim=128, output_dim=10, key=k_small)
    # Larger batch: exercises multi-step grid, ragged last tile, narrow output store.
    _check(B=1000, input_dim=128, output_dim=10, key=k_big)

    print("KERNEL_OK")
</pallas_src>

<mosaic_0001>
module attributes {stable_mosaic.version = 11 : i64} {
  func.func @_nntransfer_kernel(%arg0: i32, %arg1: memref<16x128xf32, #tpu.memory_space<vmem>>, %arg2: memref<128x256xf32, #tpu.memory_space<vmem>>, %arg3: memref<1x256xf32, #tpu.memory_space<vmem>>, %arg4: memref<256x128xf32, #tpu.memory_space<vmem>>, %arg5: memref<1x10xf32, #tpu.memory_space<vmem>>, %arg6: memref<16x10xf32, #tpu.memory_space<vmem>>) attributes {dimension_semantics = [#tpu.dimension_semantics<parallel>], iteration_bounds = array<i64: 1>, scalar_prefetch = 0 : i64, scratch_operands = 0 : i64, tpu.core_type = #tpu.core_type<tc>, window_params = [{transform_indices = @transform_0, window_bounds = array<i64: 16, 128>}, {pipeline_mode = #tpu.pipeline_mode<synchronous>, transform_indices = @transform_1, window_bounds = array<i64: 128, 256>}, {pipeline_mode = #tpu.pipeline_mode<synchronous>, transform_indices = @transform_2, window_bounds = array<i64: 1, 256>}, {pipeline_mode = #tpu.pipeline_mode<synchronous>, transform_indices = @transform_3, window_bounds = array<i64: 256, 128>}, {pipeline_mode = #tpu.pipeline_mode<synchronous>, transform_indices = @transform_4, window_bounds = array<i64: 1, 10>}, {transform_indices = @transform_5, window_bounds = array<i64: 16, 10>}]} {
    %c0 = arith.constant 0 : index
    %c0_0 = arith.constant 0 : index
    %0 = vector.load %arg1[%c0, %c0_0] : memref<16x128xf32, #tpu.memory_space<vmem>>, vector<16x128xf32>
    %c0_1 = arith.constant 0 : index
    %c0_2 = arith.constant 0 : index
    %1 = vector.load %arg2[%c0_1, %c0_2] : memref<128x256xf32, #tpu.memory_space<vmem>>, vector<128x256xf32>
    %cst = arith.constant dense<0.000000e+00> : vector<16x256xf32>
    %2 = tpu.matmul %0, %1, %cst {dimension_numbers = #tpu.dot_dimension_numbers<[1], [0], [0], [1], [0, 0, 1, 1], [], []>} : vector<16x128xf32>, vector<128x256xf32>, vector<16x256xf32> -> vector<16x256xf32>
    %c0_3 = arith.constant 0 : index
    %c0_4 = arith.constant 0 : index
    %3 = vector.load %arg3[%c0_3, %c0_4] : memref<1x256xf32, #tpu.memory_space<vmem>>, vector<1x256xf32>
    %4 = vector.broadcast %3 : vector<1x256xf32> to vector<16x256xf32>
    %5 = arith.addf %2, %4 : vector<16x256xf32>
    %cst_5 = arith.constant 0.000000e+00 : f32
    %6 = vector.broadcast %cst_5 : f32 to vector<16x256xf32>
    %7 = arith.maximumf %5, %6 : vector<16x256xf32>
    %c0_6 = arith.constant 0 : index
    %c0_7 = arith.constant 0 : index
    %8 = vector.load %arg4[%c0_6, %c0_7] : memref<256x128xf32, #tpu.memory_space<vmem>>, vector<256x128xf32>
    %cst_8 = arith.constant dense<0.000000e+00> : vector<16x128xf32>
    %9 = tpu.matmul %7, %8, %cst_8 {dimension_numbers = #tpu.dot_dimension_numbers<[1], [0], [0], [1], [0, 0, 1, 1], [], []>} : vector<16x256xf32>, vector<256x128xf32>, vector<16x128xf32> -> vector<16x128xf32>
    %10 = vector.extract_strided_slice %9 {offsets = [0, 0], sizes = [16, 10], strides = [1, 1]} : vector<16x128xf32> to vector<16x10xf32>
    %c0_9 = arith.constant 0 : index
    %c0_10 = arith.constant 0 : index
    %11 = vector.load %arg5[%c0_9, %c0_10] : memref<1x10xf32, #tpu.memory_space<vmem>>, vector<1x10xf32>
    %12 = vector.broadcast %11 : vector<1x10xf32> to vector<16x10xf32>
    %13 = arith.addf %10, %12 : vector<16x10xf32>
    %cst_11 = arith.constant dense<0xFF800000> : vector<16xf32>
    %14 = vector.multi_reduction <maximumf>, %13, %cst_11 [1] : vector<16x10xf32> to vector<16xf32>
    %15 = vector.shape_cast %14 : vector<16xf32> to vector<16x1xf32>
    %16 = vector.broadcast %15 : vector<16x1xf32> to vector<16x10xf32>
    %17 = arith.subf %13, %16 : vector<16x10xf32>
    %18 = math.exp %17 : vector<16x10xf32>
    %cst_12 = arith.constant dense<0.000000e+00> : vector<16xf32>
    %19 = vector.multi_reduction <add>, %18, %cst_12 [1] : vector<16x10xf32> to vector<16xf32>
    %20 = vector.shape_cast %19 : vector<16xf32> to vector<16x1xf32>
    %21 = vector.broadcast %20 : vector<16x1xf32> to vector<16x10xf32>
    %22 = arith.divf %18, %21 : vector<16x10xf32>
    %c0_13 = arith.constant 0 : index
    %c0_14 = arith.constant 0 : index
    %23 = vector.load %arg6[%c0_13, %c0_14] : memref<16x10xf32, #tpu.memory_space<vmem>>, vector<16x10xf32>
    tpu.vector_store %arg6[%c0_13, %c0_14], %22 {strides = array<i32>} : memref<16x10xf32, #tpu.memory_space<vmem>>, vector<16x10xf32>,
    return
  }
  func.func @transform_0(%arg0: i32) -> (i32, i32) {
    %c0_i32 = arith.constant 0 : i32
    %c0_i32_0 = arith.constant 0 : i32
    return %arg0, %c0_i32 : i32, i32
  }
  func.func @transform_1(%arg0: i32) -> (i32, i32) {
    %c0_i32 = arith.constant 0 : i32
    %c0_i32_0 = arith.constant 0 : i32
    %c0_i32_1 = arith.constant 0 : i32
    return %c0_i32, %c0_i32_0 : i32, i32
  }
  func.func @transform_2(%arg0: i32) -> (i32, i32) {
    %c0_i32 = arith.constant 0 : i32
    %c0_i32_0 = arith.constant 0 : i32
    %c0_i32_1 = arith.constant 0 : i32
    return %c0_i32, %c0_i32_0 : i32, i32
  }
  func.func @transform_3(%arg0: i32) -> (i32, i32) {
    %c0_i32 = arith.constant 0 : i32
    %c0_i32_0 = arith.constant 0 : i32
    %c0_i32_1 = arith.constant 0 : i32
    return %c0_i32, %c0_i32_0 : i32, i32
  }
  func.func @transform_4(%arg0: i32) -> (i32, i32) {
    %c0_i32 = arith.constant 0 : i32
    %c0_i32_0 = arith.constant 0 : i32
    %c0_i32_1 = arith.constant 0 : i32
    return %c0_i32, %c0_i32_0 : i32, i32
  }
  func.func @transform_5(%arg0: i32) -> (i32, i32) {
    %c0_i32 = arith.constant 0 : i32
    %c0_i32_0 = arith.constant 0 : i32
    return %arg0, %c0_i32 : i32, i32
  }
}

</mosaic_0001>

<llo_original>
// kernel: tpu_custom_call.1
$region0: #{tpu_custom_call.1}
  #allocation0 [shape = 'u32[]', space=smem, size = 0x4, offset = 0x4, fixed_abs, tag = 'smem constant byte address 0x4 - core index']
  #allocation1 [shape = 'u32[144,128]{1,0:T(1,128)}', space=vmem, size = 0x12000, scoped, tag = 'internal scratch']
  %s0 = inlined_call_operand.hbm [shape: f32[16,128], index: 0, kind: input, shape index: {}]
  %s1 = inlined_call_operand.hbm [shape: f32[128,256], index: 1, kind: input, shape index: {}]
  %s2 = inlined_call_operand.vmem [shape: f32[1,256], index: 2, kind: input, shape index: {}]
  %s3 = inlined_call_operand.hbm [shape: f32[256,128], index: 3, kind: input, shape index: {}]
  %s4 = inlined_call_operand.vmem [shape: f32[1,10], index: 4, kind: input, shape index: {}]
  %s5 = inlined_call_operand.hbm [shape: f32[16,10], index: 5, kind: output, shape index: {}]
  %s6 = sld [smem:[#allocation0]]
  $region42: #{tpu_custom_call.1} parent=0
    _
  %s8 = ssub.s32 1, %s6
  %s9 = scalar_select 0, %s8, %s6
  $region1: #{tpu_custom_call.1} parent=0
    #allocation2 [shape = 'u8[8192]{0}', space=vmem, size = 0x2000, scoped, tag = 'input window, operand 0, single buffered']
    #allocation3 [shape = 's32[1]{0}', space=sflag, size = 0x4, scoped, tag = 'scoped memory for tpu_custom_call.1']
    #allocation4 [shape = 's32[1]{0}', space=sflag, size = 0x4, scoped, tag = 'scoped memory for tpu_custom_call.1']
    #allocation5 [shape = 'u8[131072]{0}', space=vmem, size = 0x20000, scoped, tag = 'input window, operand 1, single buffered']
    #allocation6 [shape = 's32[1]{0}', space=sflag, size = 0x4, scoped, tag = 'scoped memory for tpu_custom_call.1']
    #allocation7 [shape = 'u8[131072]{0}', space=vmem, size = 0x20000, scoped, tag = 'input window, operand 3, single buffered']
    #allocation8 [shape = 'u8[8192]{0}', space=vmem, size = 0x2000, scoped, tag = 'output window, operand 0, single buffered']
    %10 = vsyncpa [#allocation3], 0
    %11 = vsyncpa [#allocation6], 0
    %12 = vsyncpa [#allocation4], 0
    // Predicated region
    $region2: #{tpu_custom_call.1} parent=1 // pred_check
      _
    $region3: #{tpu_custom_call.1} parent=1 // pred_check_branch
      %14 = sbr.rel (0) target = $region5
    $region4: #{tpu_custom_call.1} parent=1 // pred_region
      %s16 = ssub.s32 256, 256
      %17 = vsyncadd [#allocation3], %s16
      %s18 = sshll.u32 [#allocation2], 4
      %s19 = int_to_ptr.vmem [resolvable:$true] %s18
      %24 = dma.hbm_to_vmem [thread:$0]  %s0, 256, %s19, [#allocation3], 128, 128, 8
    $region5: #{tpu_custom_call.1} parent=1 // pred_fallthru
      _
    // Predicated region
    $region6: #{tpu_custom_call.1} parent=1 // pred_check
      _
    $region7: #{tpu_custom_call.1} parent=1 // pred_check_branch
      %26 = sbr.rel (0) target = $region9
    $region8: #{tpu_custom_call.1} parent=1 // pred_region
      %s28 = ssub.s32 4096, 4096
      %29 = vsyncadd [#allocation6], %s28
      %s30 = sshll.u32 [#allocation5], 4
      %s31 = int_to_ptr.vmem [resolvable:$true] %s30
      %36 = dma.hbm_to_vmem [thread:$0]  %s1, 4096, %s31, [#allocation6], 256, 256, 16
    $region9: #{tpu_custom_call.1} parent=1 // pred_fallthru
      _
    // Predicated region
    $region10: #{tpu_custom_call.1} parent=1 // pred_check
      _
    $region11: #{tpu_custom_call.1} parent=1 // pred_check_branch
      %38 = sbr.rel (0) target = $region13
    $region12: #{tpu_custom_call.1} parent=1 // pred_region
      _
    $region13: #{tpu_custom_call.1} parent=1 // pred_fallthru
      _
    // Predicated region
    $region14: #{tpu_custom_call.1} parent=1 // pred_check
      _
    $region15: #{tpu_custom_call.1} parent=1 // pred_check_branch
      %40 = sbr.rel (0) target = $region17
    $region16: #{tpu_custom_call.1} parent=1 // pred_region
      %s42 = ssub.s32 4096, 4096
      %43 = vsyncadd [#allocation6], %s42
      %s44 = sshll.u32 [#allocation7], 4
      %s45 = int_to_ptr.vmem [resolvable:$true] %s44
      %50 = dma.hbm_to_vmem [thread:$0]  %s3, 4096, %s45, [#allocation6], 128, 128, 8
    $region17: #{tpu_custom_call.1} parent=1 // pred_fallthru
      _
    // Predicated region
    $region18: #{tpu_custom_call.1} parent=1 // pred_check
      _
    $region19: #{tpu_custom_call.1} parent=1 // pred_check_branch
      %52 = sbr.rel (0) target = $region21
    $region20: #{tpu_custom_call.1} parent=1 // pred_region
      _
    $region21: #{tpu_custom_call.1} parent=1 // pred_fallthru
      _
    // Predicated region
    $region22: #{tpu_custom_call.1} parent=1 // pred_check
      _
    $region23: #{tpu_custom_call.1} parent=1 // pred_check_branch
      %54 = sbr.rel (0) target = $region25
    $region24: #{tpu_custom_call.1} parent=1 // pred_region
      %55 = dma.done [#allocation3], 256
    $region25: #{tpu_custom_call.1} parent=1 // pred_fallthru
      _
    // Predicated region
    $region26: #{tpu_custom_call.1} parent=1 // pred_check
      _
    $region27: #{tpu_custom_call.1} parent=1 // pred_check_branch
      %57 = sbr.rel (0) target = $region29
    $region28: #{tpu_custom_call.1} parent=1 // pred_region
      %58 = dma.done [#allocation6], 4096
    $region29: #{tpu_custom_call.1} parent=1 // pred_fallthru
      _
    // Predicated region
    $region30: #{tpu_custom_call.1} parent=1 // pred_check
      _
    $region31: #{tpu_custom_call.1} parent=1 // pred_check_branch
      %60 = sbr.rel (0) target = $region33
    $region32: #{tpu_custom_call.1} parent=1 // pred_region
      %61 = dma.done [#allocation6], 4096
    $region33: #{tpu_custom_call.1} parent=1 // pred_fallthru
      _
    %v62 = vld [vmem:[#allocation2] sm:$0xff]
    %v63 = vld [vmem:[#allocation2 + $0x8] sm:$0xff]
    %v64 = vld [vmem:[#allocation5] sm:$0xff]
    %v65 = vld [vmem:[#allocation5 + $0x8] sm:$0xff]
    %v66 = vld [vmem:[#allocation5 + $0x10] sm:$0xff]
    %v67 = vld [vmem:[#allocation5 + $0x18] sm:$0xff]
    %v68 = vld [vmem:[#allocation5 + $0x20] sm:$0xff]
    %v69 = vld [vmem:[#allocation5 + $0x28] sm:$0xff]
    %v70 = vld [vmem:[#allocation5 + $0x30] sm:$0xff]
    %v71 = vld [vmem:[#allocation5 + $0x38] sm:$0xff]
    %v72 = vld [vmem:[#allocation5 + $0x40] sm:$0xff]
    %v73 = vld [vmem:[#allocation5 + $0x48] sm:$0xff]
    %v74 = vld [vmem:[#allocation5 + $0x50] sm:$0xff]
    %v75 = vld [vmem:[#allocation5 + $0x58] sm:$0xff]
    %v76 = vld [vmem:[#allocation5 + $0x60] sm:$0xff]
    %v77 = vld [vmem:[#allocation5 + $0x68] sm:$0xff]
    %v78 = vld [vmem:[#allocation5 + $0x70] sm:$0xff]
    %v79 = vld [vmem:[#allocation5 + $0x78] sm:$0xff]
    %v80 = vld [vmem:[#allocation5 + $0x80] sm:$0xff]
    %v81 = vld [vmem:[#allocation5 + $0x88] sm:$0xff]
    %v82 = vld [vmem:[#allocation5 + $0x90] sm:$0xff]
    %v83 = vld [vmem:[#allocation5 + $0x98] sm:$0xff]
    %v84 = vld [vmem:[#allocation5 + $0xa0] sm:$0xff]
    %v85 = vld [vmem:[#allocation5 + $0xa8] sm:$0xff]
    %v86 = vld [vmem:[#allocation5 + $0xb0] sm:$0xff]
    %v87 = vld [vmem:[#allocation5 + $0xb8] sm:$0xff]
    %v88 = vld [vmem:[#allocation5 + $0xc0] sm:$0xff]
    %v89 = vld [vmem:[#allocation5 + $0xc8] sm:$0xff]
    %v90 = vld [vmem:[#allocation5 + $0xd0] sm:$0xff]
    %v91 = vld [vmem:[#allocation5 + $0xd8] sm:$0xff]
    %v92 = vld [vmem:[#allocation5 + $0xe0] sm:$0xff]
    %v93 = vld [vmem:[#allocation5 + $0xe8] sm:$0xff]
    %v94 = vld [vmem:[#allocation5 + $0xf0] sm:$0xff]
    %v95 = vld [vmem:[#allocation5 + $0xf8] sm:$0xff]
    %v96 = vld [vmem:[%s2] sm:$0x3]
    %v98 = vlaneseq
    %v99 = vshrl.u32 %v98, 7
    %v100 = vsub.s32 0, %v99
    %v101 = vrot.slane %v96, %v100
    %v102 = vlaneseq
    %v103 = vshrl.u32 %v102, 7
    %v104 = vsub.s32 1, %v103
    %v105 = vrot.slane %v96, %v104
    %108 = vmatprep.subr.mxu0 %v95
    %109 = vmatpush1.msra.mxu0 %v94
    %110 = vmatprep.subr.mxu0 %v93
    %111 = vmatpush1.msra.mxu0 %v92
    %112 = vmatprep.subr.mxu0 %v91
    %113 = vmatpush1.msra.mxu0 %v90
    %114 = vmatprep.subr.mxu0 %v89
    %115 = vmatpush1.msra.mxu0 %v88
    %116 = vmatprep.subr.mxu0 %v87
    %117 = vmatpush1.msra.mxu0 %v86
    %118 = vmatprep.subr.mxu0 %v85
    %119 = vmatpush1.msra.mxu0 %v84
    %120 = vmatprep.subr.mxu0 %v83
    %121 = vmatpush1.msra.mxu0 %v82
    %122 = vmatprep.subr.mxu0 %v81
    %123 = vmatpush1.msra.mxu0 %v80
    %124 = vmatprep.subr.mxu0 %v79
    %125 = vmatpush1.msra.mxu0 %v78
    %126 = vmatprep.subr.mxu0 %v77
    %127 = vmatpush1.msra.mxu0 %v76
    %128 = vmatprep.subr.mxu0 %v75
    %129 = vmatpush1.msra.mxu0 %v74
    %130 = vmatprep.subr.mxu0 %v73
    %131 = vmatpush1.msra.mxu0 %v72
    %132 = vmatprep.subr.mxu0 %v71
    %133 = vmatpush1.msra.mxu0 %v70
    %134 = vmatprep.subr.mxu0 %v69
    %135 = vmatpush1.msra.mxu0 %v68
    %136 = vmatprep.subr.mxu0 %v67
    %137 = vmatpush1.msra.mxu0 %v66
    %138 = vmatprep.subr.mxu0 %v65
    %139 = vmatpush1.msra.mxu0 %v64
    %140 = vmatprep.subr.mxu0 0.0
    %141 = vmatpush2.msra.mxu0 0.0
    %142 = vmatprep.subr.mxu0 0.0
    %143 = vmatpush2.msra.mxu0 0.0
    %144 = vmatprep.subr.mxu0 0.0
    %145 = vmatpush2.msra.mxu0 0.0
    %146 = vmatprep.subr.mxu0 0.0
    %147 = vmatpush2.msra.mxu0 0.0
    %148 = vmatprep.subr.mxu0 0.0
    %149 = vmatpush2.msra.mxu0 0.0
    %150 = vmatprep.subr.mxu0 0.0
    %151 = vmatpush2.msra.mxu0 0.0
    %152 = vmatprep.subr.mxu0 0.0
    %153 = vmatpush2.msra.mxu0 0.0
    %154 = vmatprep.subr.mxu0 0.0
    %155 = vmatpush2.msra.mxu0 0.0
    %156 = vmatprep.subr.mxu0 0.0
    %157 = vmatpush2.msra.mxu0 0.0
    %158 = vmatprep.subr.mxu0 0.0
    %159 = vmatpush2.msra.mxu0 0.0
    %160 = vmatprep.subr.mxu0 0.0
    %161 = vmatpush2.msra.mxu0 0.0
    %162 = vmatprep.subr.mxu0 0.0
    %163 = vmatpush2.msra.mxu0 0.0
    %164 = vmatprep.subr.mxu0 0.0
    %165 = vmatpush2.msra.mxu0 0.0
    %166 = vmatprep.subr.mxu0 0.0
    %167 = vmatpush2.msra.mxu0 0.0
    %168 = vmatprep.subr.mxu0 0.0
    %169 = vmatpush2.msra.mxu0 0.0
    %170 = vmatprep.subr.mxu0 0.0
    %171 = vmatpush2.msra.mxu0 0.0
    %172 = vmatprep.mubr.f32.mxu0 0.0
    %173 = vmatmul.mubr.f32.gmra.mxu0 %v62
    %v174 = vpop.f32.mrf.mxu0
    %v175 = vadd.f32 %v101, %v174
    %v176 = vpop.f32.mrf.mxu0
    %v177 = vadd.f32 %v105, %v176
    %178 = vmatprep.mubr.f32.mxu0 0.0
    %179 = vmatmul.mubr.f32.gmra.mxu0 %v63
    %v180 = vpop.f32.mrf.mxu0
    %v181 = vadd.f32 %v101, %v180
    %v182 = vpop.f32.mrf.mxu0
    %v183 = vadd.f32 %v105, %v182
    %184 = vdwg.mxu0
    %v185 = vmax.f32 %v175, 0.0
    %v186 = vmax.f32 %v177, 0.0
    %v187 = vmax.f32 %v181, 0.0
    %v188 = vmax.f32 %v183, 0.0
    %v189 = vld [vmem:[#allocation7] sm:$0xff]
    %v190 = vld [vmem:[#allocation7 + $0x8] sm:$0xff]
    %v191 = vld [vmem:[#allocation7 + $0x10] sm:$0xff]
    %v192 = vld [vmem:[#allocation7 + $0x18] sm:$0xff]
    %v193 = vld [vmem:[#allocation7 + $0x20] sm:$0xff]
    %v194 = vld [vmem:[#allocation7 + $0x28] sm:$0xff]
    %v195 = vld [vmem:[#allocation7 + $0x30] sm:$0xff]
    %v196 = vld [vmem:[#allocation7 + $0x38] sm:$0xff]
    %v197 = vld [vmem:[#allocation7 + $0x40] sm:$0xff]
    %v198 = vld [vmem:[#allocation7 + $0x48] sm:$0xff]
    %v199 = vld [vmem:[#allocation7 + $0x50] sm:$0xff]
    %v200 = vld [vmem:[#allocation7 + $0x58] sm:$0xff]
    %v201 = vld [vmem:[#allocation7 + $0x60] sm:$0xff]
    %v202 = vld [vmem:[#allocation7 + $0x68] sm:$0xff]
    %v203 = vld [vmem:[#allocation7 + $0x70] sm:$0xff]
    %v204 = vld [vmem:[#allocation7 + $0x78] sm:$0xff]
    %v205 = vld [vmem:[#allocation7 + $0x80] sm:$0xff]
    %v206 = vld [vmem:[#allocation7 + $0x88] sm:$0xff]
    %v207 = vld [vmem:[#allocation7 + $0x90] sm:$0xff]
    %v208 = vld [vmem:[#allocation7 + $0x98] sm:$0xff]
    %v209 = vld [vmem:[#allocation7 + $0xa0] sm:$0xff]
    %v210 = vld [vmem:[#allocation7 + $0xa8] sm:$0xff]
    %v211 = vld [vmem:[#allocation7 + $0xb0] sm:$0xff]
    %v212 = vld [vmem:[#allocation7 + $0xb8] sm:$0xff]
    %v213 = vld [vmem:[#allocation7 + $0xc0] sm:$0xff]
    %v214 = vld [vmem:[#allocation7 + $0xc8] sm:$0xff]
    %v215 = vld [vmem:[#allocation7 + $0xd0] sm:$0xff]
    %v216 = vld [vmem:[#allocation7 + $0xd8] sm:$0xff]
    %v217 = vld [vmem:[#allocation7 + $0xe0] sm:$0xff]
    %v218 = vld [vmem:[#allocation7 + $0xe8] sm:$0xff]
    %v219 = vld [vmem:[#allocation7 + $0xf0] sm:$0xff]
    %v220 = vld [vmem:[#allocation7 + $0xf8] sm:$0xff]
    %221 = vmatprep.subr.mxu0 0.0
    %222 = vmatpush1.msra.mxu0 %v204
    %223 = vmatprep.subr.mxu0 0.0
    %224 = vmatpush1.msra.mxu0 %v203
    %225 = vmatprep.subr.mxu0 0.0
    %226 = vmatpush1.msra.mxu0 %v202
    %227 = vmatprep.subr.mxu0 0.0
    %228 = vmatpush1.msra.mxu0 %v201
    %229 = vmatprep.subr.mxu0 0.0
    %230 = vmatpush1.msra.mxu0 %v200
    %231 = vmatprep.subr.mxu0 0.0
    %232 = vmatpush1.msra.mxu0 %v199
    %233 = vmatprep.subr.mxu0 0.0
    %234 = vmatpush1.msra.mxu0 %v198
    %235 = vmatprep.subr.mxu0 0.0
    %236 = vmatpush1.msra.mxu0 %v197
    %237 = vmatprep.subr.mxu0 0.0
    %238 = vmatpush1.msra.mxu0 %v196
    %239 = vmatprep.subr.mxu0 0.0
    %240 = vmatpush1.msra.mxu0 %v195
    %241 = vmatprep.subr.mxu0 0.0
    %242 = vmatpush1.msra.mxu0 %v194
    %243 = vmatprep.subr.mxu0 0.0
    %244 = vmatpush1.msra.mxu0 %v193
    %245 = vmatprep.subr.mxu0 0.0
    %246 = vmatpush1.msra.mxu0 %v192
    %247 = vmatprep.subr.mxu0 0.0
    %248 = vmatpush1.msra.mxu0 %v191
    %249 = vmatprep.subr.mxu0 0.0
    %250 = vmatpush1.msra.mxu0 %v190
    %251 = vmatprep.subr.mxu0 0.0
    %252 = vmatpush1.msra.mxu0 %v189
    %253 = vmatprep.subr.mxu0 0.0
    %254 = vmatpush2.msra.mxu0 %v220
    %255 = vmatprep.subr.mxu0 0.0
    %256 = vmatpush2.msra.mxu0 %v219
    %257 = vmatprep.subr.mxu0 0.0
    %258 = vmatpush2.msra.mxu0 %v218
    %259 = vmatprep.subr.mxu0 0.0
    %260 = vmatpush2.msra.mxu0 %v217
    %261 = vmatprep.subr.mxu0 0.0
    %262 = vmatpush2.msra.mxu0 %v216
    %263 = vmatprep.subr.mxu0 0.0
    %264 = vmatpush2.msra.mxu0 %v215
    %265 = vmatprep.subr.mxu0 0.0
    %266 = vmatpush2.msra.mxu0 %v214
    %267 = vmatprep.subr.mxu0 0.0
    %268 = vmatpush2.msra.mxu0 %v213
    %269 = vmatprep.subr.mxu0 0.0
    %270 = vmatpush2.msra.mxu0 %v212
    %271 = vmatprep.subr.mxu0 0.0
    %272 = vmatpush2.msra.mxu0 %v211
    %273 = vmatprep.subr.mxu0 0.0
    %274 = vmatpush2.msra.mxu0 %v210
    %275 = vmatprep.subr.mxu0 0.0
    %276 = vmatpush2.msra.mxu0 %v209
    %277 = vmatprep.subr.mxu0 0.0
    %278 = vmatpush2.msra.mxu0 %v208
    %279 = vmatprep.subr.mxu0 0.0
    %280 = vmatpush2.msra.mxu0 %v207
    %281 = vmatprep.subr.mxu0 0.0
    %282 = vmatpush2.msra.mxu0 %v206
    %283 = vmatprep.subr.mxu0 0.0
    %284 = vmatpush2.msra.mxu0 %v205
    %285 = vmatprep.mubr.f32.mxu0 %v186
    %286 = vmatmul.mubr.f32.gmra.mxu0 %v185
    %v287 = vpop.f32.mrf.mxu0
    %v288 = vadd.f32 0.0, %v287
    %v289 = vpop.f32.mrf.mxu0
    %290 = vmatprep.mubr.f32.mxu0 %v188
    %291 = vmatmul.mubr.f32.gmra.mxu0 %v187
    %v292 = vpop.f32.mrf.mxu0
    %v293 = vadd.f32 0.0, %v292
    %v294 = vpop.f32.mrf.mxu0
    %295 = vdwg.mxu0
    %v296 = vld [vmem:[%s4] sm:$0x1]
    %v298 = vlaneseq
    %v299 = vshrl.u32 %v298, 7
    %v300 = vsub.s32 0, %v299
    %v301 = vrot.slane %v296, %v300
    %v303 = vadd.f32 %v288, %v301
    %v304 = vadd.f32 %v293, %v301
    %vm305 = vcmask 80896
    %v306 = vsel %vm305, %v303, -inf
    %307 = vmax.xlane.f32.xlu0 %v306
    %v308 = vpop.xlane.xlu0 %307
    %v309 = vsel %vm305, %v304, -inf
    %310 = vmax.xlane.f32.xlu0 %v309
    %v311 = vpop.xlane.xlu0 %310
    %v312 = vsub.f32 %v303, %v308
    %v313 = vsub.f32 %v304, %v311
    %v314 = vmul.f32 %v312, 1.442695
    %v315 = vpow.pop %v314
    %v316 = vmul.f32 %v313, 1.442695
    %v317 = vpow.pop %v316
    %v318 = vsel %vm305, %v315, 0.0
    %319 = vadd.xlane.f32.xlu0 %v318
    %v320 = vpop.xlane.xlu0 %319
    %v321 = vsel %vm305, %v317, 0.0
    %322 = vadd.xlane.f32.xlu0 %v321
    %v323 = vpop.xlane.xlu0 %322
    %v324 = vrcp.pop %v320
    %v325 = vmul.f32 %v315, %v324
    %v326 = vrcp.pop %v323
    %v327 = vmul.f32 %v317, %v326
    %328 = vst.msk [vmem:[#allocation8] sm:$0xff] %vm305, %v325
    %329 = vst.msk [vmem:[#allocation8 + $0x8] sm:$0xff] %vm305, %v327
    // Predicated region
    $region34: #{tpu_custom_call.1} parent=1 // pred_check
      _
    $region35: #{tpu_custom_call.1} parent=1 // pred_check_branch
      %331 = sbr.rel (0) target = $region37
    $region36: #{tpu_custom_call.1} parent=1 // pred_region
      %s333 = ssub.s32 256, 256
      %334 = vsyncadd [#allocation4], %s333
      %s335 = sshll.u32 [#allocation8], 4
      %s336 = int_to_ptr.vmem [resolvable:$true] %s335
      %341 = dma.vmem_to_hbm [thread:$0]  %s336, 256, %s5, [#allocation4], 128, 128, 8
    $region37: #{tpu_custom_call.1} parent=1 // pred_fallthru
      _
    // Predicated region
    $region38: #{tpu_custom_call.1} parent=1 // pred_check
      _
    $region39: #{tpu_custom_call.1} parent=1 // pred_check_branch
      %343 = sbr.rel (0) target = $region41
    $region40: #{tpu_custom_call.1} parent=1 // pred_region
      %344 = dma.done [#allocation4], 256
    $region41: #{tpu_custom_call.1} parent=1 // pred_fallthru
      _
    %345 = vsyncpa [#allocation3], 1
    %346 = vsyncpa [#allocation6], 1
    %347 = vsyncpa [#allocation4], 1

</llo_original>
